<compile_context>
chip_gen: v7x
topology: tpu7x:2x2x1
jax: 0.10.0
libtpu: 0.0.40
codegen_flags: <defaults>
</compile_context>

<pallas_src>
import jax
import jax.numpy as jnp
from jax.experimental import pallas as pl
from jax.experimental.pallas import tpu as pltpu


def _round_up(x: int, m: int) -> int:
    return ((x + m - 1) // m) * m


def _lane_align(dim: int) -> int:
    # v6e/v7x MXUs are 256 wide: use 256-multiples once the dim is big enough;
    # 128 keeps tiny dims (e.g. output_size=16) from 16x padding inflation.
    return 256 if dim >= 256 else 128


# --------------------------------------------------------------------------
# Kernel
# --------------------------------------------------------------------------
def dual_output_kernel(x_ref, w1_ref, b1_ref, w2_ref, b2_ref, o_ref):
    # x arrives in f32; cast to bf16 only at the MXU input (in-kernel cast is
    # cheaper than a separate host-side pad/cast pass over HBM).
    x = x_ref[...].astype(jnp.bfloat16)
    # fc1: (TB, in)bf16 @ (in, Hp)bf16 -> f32 accumulate on the MXU.
    h = jnp.dot(x, w1_ref[...], preferred_element_type=jnp.float32)
    # Bias + ReLU in f32 (VPU); padded hidden columns have zero W/b -> stay 0.
    h = jnp.maximum(h + b1_ref[...], 0.0)
    # fc2: cast the activation to bf16 only at the MXU input.
    z = jnp.dot(h.astype(jnp.bfloat16), w2_ref[...],
                preferred_element_type=jnp.float32)
    z = z + b2_ref[...]
    # sigmoid(z) == 0.5 * tanh(0.5 * z) + 0.5 : a single EUP op, numerically
    # safe for large |z| (no exp -> inf intermediate).
    o_ref[...] = (0.5 * jnp.tanh(0.5 * z) + 0.5).astype(o_ref.dtype)


# --------------------------------------------------------------------------
# One-time (per-model) parameter prep: pad + bf16-cast the weights.
# Hoisted out of the per-call path so forward() never pays an extra HBM
# read+write pass over the weight matrices.
# --------------------------------------------------------------------------
def prepare_params(w1, b1, w2, b2):
    in_size, hidden = w1.shape
    out_size = w2.shape[1]
    hid_p = _round_up(max(hidden, 1), _lane_align(hidden))
    out_p = _round_up(max(out_size, 1), _lane_align(out_size))

    w1p = w1.astype(jnp.bfloat16)
    b1p = b1.astype(jnp.float32).reshape(1, -1)
    if hid_p != hidden:
        w1p = jnp.zeros((in_size, hid_p), jnp.bfloat16).at[:, :hidden].set(w1p)
        b1p = jnp.zeros((1, hid_p), jnp.float32).at[:, :hidden].set(b1p)

    w2p = w2.astype(jnp.bfloat16)
    b2p = b2.astype(jnp.float32).reshape(1, -1)
    if hid_p != hidden or out_p != out_size:
        w2p = jnp.zeros((hid_p, out_p), jnp.bfloat16).at[:hidden, :out_size].set(w2p)
    if out_p != out_size:
        b2p = jnp.zeros((1, out_p), jnp.float32).at[:, :out_size].set(b2p)

    # TODO(synk): on v7x, fp8 weight storage would halve resident VMEM further.
    return dict(w1p=w1p, b1p=b1p, w2p=w2p, b2p=b2p,
                in_size=in_size, hidden=hidden, out_size=out_size,
                hid_p=hid_p, out_p=out_p)


def _pick_batch_tile(B, in_size, hid_p, out_p, weight_bytes,
                     *, max_tb=512, vmem_budget=40 << 20):
    """Pick a batch tile that fits v7x's 64 MiB VMEM with headroom."""
    # Per batch-row VMEM cost inside the pipeline:
    #   x tile   : f32, double-buffered        -> 2 * in_size * 4
    #   out tile : bf16, double-buffered       -> 2 * out_p  * 2
    #   hidden   : f32 h + bf16 MXU copy       -> hid_p * (4 + 2)
    per_row = 2 * in_size * 4 + 2 * out_p * 2 + hid_p * 6
    avail = max(vmem_budget - weight_bytes, 1 << 20)
    tb = min(max_tb, avail // per_row, _round_up(B, 8))
    tb = max(8, (tb // 8) * 8)
    # At real batch sizes make sure the grid has >= 2 tiles so v7x's two
    # TensorCores both get work under dimension_semantics=("parallel",).
    if B >= 256 and _round_up(B, tb) // tb < 2:
        tb = max(8, _round_up((B + 1) // 2, 8))
    return tb


# --------------------------------------------------------------------------
# Forward
# --------------------------------------------------------------------------
def dual_output_forward(x, params, *, out_dtype=jnp.bfloat16):
    """x: (B, input_size) float; params from prepare_params().
    Returns (B, output_size) in out_dtype (bf16 halves the writeback)."""
    B, in_size = x.shape
    assert in_size == params["in_size"]
    hid_p, out_p = params["hid_p"], params["out_p"]
    out_size = params["out_size"]

    weight_bytes = (in_size * hid_p * 2 + hid_p * out_p * 2
                    + hid_p * 4 + out_p * 4)
    tb = _pick_batch_tile(B, in_size, hid_p, out_p, weight_bytes)
    b_pad = _round_up(B, tb)

    # Pad batch rows only when needed; x stays in its original dtype (kernel
    # casts to bf16 at the MXU input).
    xp = x if b_pad == B else jnp.pad(x, ((0, b_pad - B), (0, 0)))

    grid = (b_pad // tb,)

    # Explicit scoped-VMEM budget: double-buffered x/out tiles + single-
    # buffered weights + f32/bf16 hidden scratch, plus slack for internals.
    per_row = 2 * in_size * 4 + 2 * out_p * 2 + hid_p * 6
    vmem_limit = int(min(max(weight_bytes + tb * per_row + (4 << 20),
                             32 << 20), 60 << 20))

    resident = dict(pipeline_mode=pl.Buffered(1))  # never re-fetched

    out_padded = pl.pallas_call(
        dual_output_kernel,
        out_shape=jax.ShapeDtypeStruct((b_pad, out_p), out_dtype),
        grid=grid,
        in_specs=[
            # Activations stream per batch tile (default double-buffering).
            pl.BlockSpec((tb, in_size), lambda i: (i, 0)),
            # Weights / biases: constant block index -> VMEM-resident,
            # single-buffered (Buffered(1)) since they never change block.
            pl.BlockSpec((in_size, hid_p), lambda i: (0, 0), **resident),
            pl.BlockSpec((1, hid_p), lambda i: (0, 0), **resident),
            pl.BlockSpec((hid_p, out_p), lambda i: (0, 0), **resident),
            pl.BlockSpec((1, out_p), lambda i: (0, 0), **resident),
        ],
        out_specs=pl.BlockSpec((tb, out_p), lambda i: (i, 0)),
        compiler_params=pltpu.CompilerParams(
            dimension_semantics=("parallel",),   # batch tiles are independent
            vmem_limit_bytes=vmem_limit,
        ),
    )(xp, params["w1p"], params["b1p"], params["w2p"], params["b2p"])

    # Strip batch / output-lane padding. (In a real pipeline, fuse this slice
    # into the downstream consumer instead of materializing it.)
    return out_padded[:B, :out_size]


def init_params(key, input_size, hidden_size, output_size, dtype=jnp.float32):
    """Deterministic PyTorch-style init: U(-1/sqrt(fan_in), 1/sqrt(fan_in))."""
    k1, k2, k3, k4 = jax.random.split(key, 4)
    bound1 = 1.0 / (input_size ** 0.5)
    bound2 = 1.0 / (hidden_size ** 0.5)
    # Weights stored as (in, out) — transpose of PyTorch's (out, in) layout.
    w1 = jax.random.uniform(k1, (input_size, hidden_size), dtype, -bound1, bound1)
    b1 = jax.random.uniform(k2, (hidden_size,), dtype, -bound1, bound1)
    w2 = jax.random.uniform(k3, (hidden_size, output_size), dtype, -bound2, bound2)
    b2 = jax.random.uniform(k4, (output_size,), dtype, -bound2, bound2)
    return w1, b1, w2, b2


if __name__ == "__main__":
    input_size, hidden_size, output_size = 32, 64, 16
    batch = 8  # toy size; the tiling/VMEM logic targets real batch sizes

    key = jax.random.PRNGKey(0)
    kx, kp = jax.random.split(key)
    x = jax.random.normal(kx, (batch, input_size), jnp.float32)
    w1, b1, w2, b2 = init_params(kp, input_size, hidden_size, output_size)

    params = prepare_params(w1, b1, w2, b2)   # one-time weight prep
    out = dual_output_forward(x, params)
    out = jax.block_until_ready(out)

    # Pure-JAX f32 reference of the same math (kernel uses bf16 MXU inputs
    # and a bf16 output, hence the relaxed absolute tolerance).
    ref = jax.nn.sigmoid(jnp.maximum(x @ w1 + b1, 0.0) @ w2 + b2)
    assert out.shape == (batch, output_size)
    err = jnp.max(jnp.abs(out.astype(jnp.float32) - ref))
    assert jnp.allclose(out.astype(jnp.float32), ref, atol=2e-2, rtol=0.0), \
        f"max abs err {err}"

    print("KERNEL_OK")
</pallas_src>

<mosaic_0001>
module attributes {stable_mosaic.version = 11 : i64} {
  func.func @dual_output_kernel(%arg0: i32, %arg1: memref<8x32xf32, #tpu.memory_space<vmem>>, %arg2: memref<32x128xbf16, #tpu.memory_space<vmem>>, %arg3: memref<1x128xf32, #tpu.memory_space<vmem>>, %arg4: memref<128x128xbf16, #tpu.memory_space<vmem>>, %arg5: memref<1x128xf32, #tpu.memory_space<vmem>>, %arg6: memref<8x128xbf16, #tpu.memory_space<vmem>>) attributes {dimension_semantics = [#tpu.dimension_semantics<parallel>], iteration_bounds = array<i64: 1>, scalar_prefetch = 0 : i64, scratch_operands = 0 : i64, tpu.core_type = #tpu.core_type<tc>, window_params = [{transform_indices = @transform_0, window_bounds = array<i64: 8, 32>}, {pipeline_mode = #tpu.pipeline_mode<synchronous>, transform_indices = @transform_1, window_bounds = array<i64: 32, 128>}, {pipeline_mode = #tpu.pipeline_mode<synchronous>, transform_indices = @transform_2, window_bounds = array<i64: 1, 128>}, {pipeline_mode = #tpu.pipeline_mode<synchronous>, transform_indices = @transform_3, window_bounds = array<i64: 128, 128>}, {pipeline_mode = #tpu.pipeline_mode<synchronous>, transform_indices = @transform_4, window_bounds = array<i64: 1, 128>}, {transform_indices = @transform_5, window_bounds = array<i64: 8, 128>}]} {
    %c0 = arith.constant 0 : index
    %c0_0 = arith.constant 0 : index
    %0 = vector.load %arg1[%c0, %c0_0] : memref<8x32xf32, #tpu.memory_space<vmem>>, vector<8x32xf32>
    %1 = arith.truncf %0 : vector<8x32xf32> to vector<8x32xbf16>
    %c0_1 = arith.constant 0 : index
    %c0_2 = arith.constant 0 : index
    %2 = vector.load %arg2[%c0_1, %c0_2] : memref<32x128xbf16, #tpu.memory_space<vmem>>, vector<32x128xbf16>
    %cst = arith.constant dense<0.000000e+00> : vector<8x128xf32>
    %3 = tpu.matmul %1, %2, %cst {dimension_numbers = #tpu.dot_dimension_numbers<[1], [0], [0], [1], [0, 0, 1, 1], [], []>} : vector<8x32xbf16>, vector<32x128xbf16>, vector<8x128xf32> -> vector<8x128xf32>
    %c0_3 = arith.constant 0 : index
    %c0_4 = arith.constant 0 : index
    %4 = vector.load %arg3[%c0_3, %c0_4] : memref<1x128xf32, #tpu.memory_space<vmem>>, vector<1x128xf32>
    %5 = vector.broadcast %4 : vector<1x128xf32> to vector<8x128xf32>
    %6 = arith.addf %3, %5 : vector<8x128xf32>
    %cst_5 = arith.constant 0.000000e+00 : f32
    %7 = vector.broadcast %cst_5 : f32 to vector<8x128xf32>
    %8 = arith.maximumf %6, %7 : vector<8x128xf32>
    %9 = arith.truncf %8 : vector<8x128xf32> to vector<8x128xbf16>
    %c0_6 = arith.constant 0 : index
    %c0_7 = arith.constant 0 : index
    %10 = vector.load %arg4[%c0_6, %c0_7] : memref<128x128xbf16, #tpu.memory_space<vmem>>, vector<128x128xbf16>
    %cst_8 = arith.constant dense<0.000000e+00> : vector<8x128xf32>
    %11 = tpu.matmul %9, %10, %cst_8 {dimension_numbers = #tpu.dot_dimension_numbers<[1], [0], [0], [1], [0, 0, 1, 1], [], []>} : vector<8x128xbf16>, vector<128x128xbf16>, vector<8x128xf32> -> vector<8x128xf32>
    %c0_9 = arith.constant 0 : index
    %c0_10 = arith.constant 0 : index
    %12 = vector.load %arg5[%c0_9, %c0_10] : memref<1x128xf32, #tpu.memory_space<vmem>>, vector<1x128xf32>
    %13 = vector.broadcast %12 : vector<1x128xf32> to vector<8x128xf32>
    %14 = arith.addf %11, %13 : vector<8x128xf32>
    %cst_11 = arith.constant 5.000000e-01 : f32
    %15 = vector.broadcast %cst_11 : f32 to vector<8x128xf32>
    %16 = arith.mulf %15, %14 : vector<8x128xf32>
    %17 = math.tanh %16 : vector<8x128xf32>
    %cst_12 = arith.constant 5.000000e-01 : f32
    %18 = vector.broadcast %cst_12 : f32 to vector<8x128xf32>
    %19 = arith.mulf %18, %17 : vector<8x128xf32>
    %cst_13 = arith.constant 5.000000e-01 : f32
    %20 = vector.broadcast %cst_13 : f32 to vector<8x128xf32>
    %21 = arith.addf %19, %20 : vector<8x128xf32>
    %22 = arith.truncf %21 : vector<8x128xf32> to vector<8x128xbf16>
    %c0_14 = arith.constant 0 : index
    %c0_15 = arith.constant 0 : index
    %23 = vector.load %arg6[%c0_14, %c0_15] : memref<8x128xbf16, #tpu.memory_space<vmem>>, vector<8x128xbf16>
    tpu.vector_store %arg6[%c0_14, %c0_15], %22 {strides = array<i32>} : memref<8x128xbf16, #tpu.memory_space<vmem>>, vector<8x128xbf16>,
    return
  }
  func.func @transform_0(%arg0: i32) -> (i32, i32) {
    %c0_i32 = arith.constant 0 : i32
    %c0_i32_0 = arith.constant 0 : i32
    return %arg0, %c0_i32 : i32, i32
  }
  func.func @transform_1(%arg0: i32) -> (i32, i32) {
    %c0_i32 = arith.constant 0 : i32
    %c0_i32_0 = arith.constant 0 : i32
    %c0_i32_1 = arith.constant 0 : i32
    return %c0_i32, %c0_i32_0 : i32, i32
  }
  func.func @transform_2(%arg0: i32) -> (i32, i32) {
    %c0_i32 = arith.constant 0 : i32
    %c0_i32_0 = arith.constant 0 : i32
    %c0_i32_1 = arith.constant 0 : i32
    return %c0_i32, %c0_i32_0 : i32, i32
  }
  func.func @transform_3(%arg0: i32) -> (i32, i32) {
    %c0_i32 = arith.constant 0 : i32
    %c0_i32_0 = arith.constant 0 : i32
    %c0_i32_1 = arith.constant 0 : i32
    return %c0_i32, %c0_i32_0 : i32, i32
  }
  func.func @transform_4(%arg0: i32) -> (i32, i32) {
    %c0_i32 = arith.constant 0 : i32
    %c0_i32_0 = arith.constant 0 : i32
    %c0_i32_1 = arith.constant 0 : i32
    return %c0_i32, %c0_i32_0 : i32, i32
  }
  func.func @transform_5(%arg0: i32) -> (i32, i32) {
    %c0_i32 = arith.constant 0 : i32
    %c0_i32_0 = arith.constant 0 : i32
    return %arg0, %c0_i32 : i32, i32
  }
}

</mosaic_0001>

<llo_original>
// kernel: tpu_custom_call.1
$region0: #{tpu_custom_call.1}
  #allocation0 [shape = 'u32[]', space=smem, size = 0x4, offset = 0x4, fixed_abs, tag = 'smem constant byte address 0x4 - core index']
  #allocation1 [shape = 'u32[144,128]{1,0:T(1,128)}', space=vmem, size = 0x12000, scoped, tag = 'internal scratch']
  %s0 = inlined_call_operand.hbm [shape: f32[8,32], index: 0, kind: input, shape index: {}]
  %s1 = inlined_call_operand.hbm [shape: bf16[32,128], index: 1, kind: input, shape index: {}]
  %s2 = inlined_call_operand.vmem [shape: f32[1,128], index: 2, kind: input, shape index: {}]
  %s3 = inlined_call_operand.hbm [shape: bf16[128,128], index: 3, kind: input, shape index: {}]
  %s4 = inlined_call_operand.vmem [shape: f32[1,128], index: 4, kind: input, shape index: {}]
  %s5 = inlined_call_operand.hbm [shape: bf16[8,128], index: 5, kind: output, shape index: {}]
  %s6 = sld [smem:[#allocation0]]
  $region42: #{tpu_custom_call.1} parent=0
    _
  %s8 = ssub.s32 1, %s6
  %s9 = scalar_select 0, %s8, %s6
  $region1: #{tpu_custom_call.1} parent=0
    #allocation2 [shape = 'u8[4096]{0}', space=vmem, size = 0x1000, scoped, tag = 'input window, operand 0, single buffered']
    #allocation3 [shape = 's32[1]{0}', space=sflag, size = 0x4, scoped, tag = 'scoped memory for tpu_custom_call.1']
    #allocation4 [shape = 's32[1]{0}', space=sflag, size = 0x4, scoped, tag = 'scoped memory for tpu_custom_call.1']
    #allocation5 [shape = 'u8[8192]{0}', space=vmem, size = 0x2000, scoped, tag = 'input window, operand 1, single buffered']
    #allocation6 [shape = 's32[1]{0}', space=sflag, size = 0x4, scoped, tag = 'scoped memory for tpu_custom_call.1']
    #allocation7 [shape = 'u8[32768]{0}', space=vmem, size = 0x8000, scoped, tag = 'input window, operand 3, single buffered']
    #allocation8 [shape = 'u8[2048]{0}', space=vmem, size = 0x800, scoped, tag = 'output window, operand 0, single buffered']
    %10 = vsyncpa [#allocation3], 0
    %11 = vsyncpa [#allocation6], 0
    %12 = vsyncpa [#allocation4], 0
    // Predicated region
    $region2: #{tpu_custom_call.1} parent=1 // pred_check
      _
    $region3: #{tpu_custom_call.1} parent=1 // pred_check_branch
      %14 = sbr.rel (0) target = $region5
    $region4: #{tpu_custom_call.1} parent=1 // pred_region
      %s16 = ssub.s32 128, 128
      %17 = vsyncadd [#allocation3], %s16
      %s19 = sshll.u32 [#allocation2], 4
      %s20 = int_to_ptr.vmem [resolvable:$true] %s19
      %22 = dma.hbm_to_vmem [thread:$0]  %s0, 128, %s20, [#allocation3]
    $region5: #{tpu_custom_call.1} parent=1 // pred_fallthru
      _
    // Predicated region
    $region6: #{tpu_custom_call.1} parent=1 // pred_check
      _
    $region7: #{tpu_custom_call.1} parent=1 // pred_check_branch
      %24 = sbr.rel (0) target = $region9
    $region8: #{tpu_custom_call.1} parent=1 // pred_region
      %s26 = ssub.s32 256, 256
      %27 = vsyncadd [#allocation6], %s26
      %s28 = sshll.u32 [#allocation5], 4
      %s29 = int_to_ptr.vmem [resolvable:$true] %s28
      %34 = dma.hbm_to_vmem [thread:$0]  %s1, 256, %s29, [#allocation6], 64, 64, 4
    $region9: #{tpu_custom_call.1} parent=1 // pred_fallthru
      _
    // Predicated region
    $region10: #{tpu_custom_call.1} parent=1 // pred_check
      _
    $region11: #{tpu_custom_call.1} parent=1 // pred_check_branch
      %36 = sbr.rel (0) target = $region13
    $region12: #{tpu_custom_call.1} parent=1 // pred_region
      _
    $region13: #{tpu_custom_call.1} parent=1 // pred_fallthru
      _
    // Predicated region
    $region14: #{tpu_custom_call.1} parent=1 // pred_check
      _
    $region15: #{tpu_custom_call.1} parent=1 // pred_check_branch
      %38 = sbr.rel (0) target = $region17
    $region16: #{tpu_custom_call.1} parent=1 // pred_region
      %s40 = ssub.s32 1024, 1024
      %41 = vsyncadd [#allocation6], %s40
      %s42 = sshll.u32 [#allocation7], 4
      %s43 = int_to_ptr.vmem [resolvable:$true] %s42
      %48 = dma.hbm_to_vmem [thread:$0]  %s3, 1024, %s43, [#allocation6], 64, 64, 4
    $region17: #{tpu_custom_call.1} parent=1 // pred_fallthru
      _
    // Predicated region
    $region18: #{tpu_custom_call.1} parent=1 // pred_check
      _
    $region19: #{tpu_custom_call.1} parent=1 // pred_check_branch
      %50 = sbr.rel (0) target = $region21
    $region20: #{tpu_custom_call.1} parent=1 // pred_region
      _
    $region21: #{tpu_custom_call.1} parent=1 // pred_fallthru
      _
    // Predicated region
    $region22: #{tpu_custom_call.1} parent=1 // pred_check
      _
    $region23: #{tpu_custom_call.1} parent=1 // pred_check_branch
      %52 = sbr.rel (0) target = $region25
    $region24: #{tpu_custom_call.1} parent=1 // pred_region
      %53 = dma.done [#allocation3], 128
    $region25: #{tpu_custom_call.1} parent=1 // pred_fallthru
      _
    // Predicated region
    $region26: #{tpu_custom_call.1} parent=1 // pred_check
      _
    $region27: #{tpu_custom_call.1} parent=1 // pred_check_branch
      %55 = sbr.rel (0) target = $region29
    $region28: #{tpu_custom_call.1} parent=1 // pred_region
      %56 = dma.done [#allocation6], 256
    $region29: #{tpu_custom_call.1} parent=1 // pred_fallthru
      _
    // Predicated region
    $region30: #{tpu_custom_call.1} parent=1 // pred_check
      _
    $region31: #{tpu_custom_call.1} parent=1 // pred_check_branch
      %58 = sbr.rel (0) target = $region33
    $region32: #{tpu_custom_call.1} parent=1 // pred_region
      %59 = dma.done [#allocation6], 1024
    $region33: #{tpu_custom_call.1} parent=1 // pred_fallthru
      _
    %v61 = vld [vmem:[#allocation2] sm:$0xff]
    %v62 = vpack.c.bf16 %v61, %v61
    %v63 = vld [vmem:[#allocation5] sm:$0xf]
    %v64 = vld [vmem:[#allocation5 + $0x4] sm:$0xf]
    %v65 = vld [vmem:[#allocation5 + $0x8] sm:$0xf]
    %v66 = vld [vmem:[#allocation5 + $0xc] sm:$0xf]
    %v67 = vld [vmem:[%s2] sm:$0x1]
    %v69 = vlaneseq
    %v70 = vshrl.u32 %v69, 7
    %v71 = vsub.s32 0, %v70
    %v72 = vrot.slane %v67, %v71
    %v78 = vunpack.c.l.b16 %v63
    %v79 = vunpack.c.l.b16 %v64
    %v80 = vunpack.c.l.b16 %v65
    %v81 = vunpack.c.l.b16 %v66
    %v82 = vpack.c.b16 %v79, %v78
    %v83 = vpack.c.b16 %v81, %v80
    %vm86 = vcmask 261120
    %v88 = vsel %vm86, %v62, 0
    %90 = vmatprep.subr.bf16.mxu0 0
    %91 = vmatpush1.bf16.msra.mxu0 %v82
    %92 = vmatprep.subr.bf16.mxu0 0
    %93 = vmatpush1.bf16.msra.mxu0 %v83
    %94 = vmatprep.subr.bf16.mxu0 0
    %95 = vmatpush1.bf16.msra.mxu0 0
    %96 = vmatprep.subr.bf16.mxu0 0
    %97 = vmatpush1.bf16.msra.mxu0 0
    %98 = vmatprep.subr.bf16.mxu0 0
    %99 = vmatpush1.bf16.msra.mxu0 0
    %100 = vmatprep.subr.bf16.mxu0 0
    %101 = vmatpush1.bf16.msra.mxu0 0
    %102 = vmatprep.subr.bf16.mxu0 0
    %103 = vmatpush1.bf16.msra.mxu0 0
    %104 = vmatprep.subr.bf16.mxu0 0
    %105 = vmatpush1.bf16.msra.mxu0 0
    %106 = vmatprep.subr.bf16.mxu0 0
    %107 = vmatpush1.bf16.msra.mxu0 0
    %108 = vmatprep.subr.bf16.mxu0 0
    %109 = vmatpush1.bf16.msra.mxu0 0
    %110 = vmatprep.subr.bf16.mxu0 0
    %111 = vmatpush1.bf16.msra.mxu0 0
    %112 = vmatprep.subr.bf16.mxu0 0
    %113 = vmatpush1.bf16.msra.mxu0 0
    %114 = vmatprep.subr.bf16.mxu0 0
    %115 = vmatpush1.bf16.msra.mxu0 0
    %116 = vmatprep.subr.bf16.mxu0 0
    %117 = vmatpush1.bf16.msra.mxu0 0
    %118 = vmatprep.subr.bf16.mxu0 0
    %119 = vmatpush1.bf16.msra.mxu0 0
    %120 = vmatprep.subr.bf16.mxu0 0
    %121 = vmatpush1.bf16.msra.mxu0 0
    %122 = vmatprep.mubr.bf16.mxu0 0
    %123 = vmatmul.mubr.bf16.gmra.mrb[0].mxu0 %v88
    %v124 = vpop.f32.mrb[0].mxu0
    %v125 = vadd.f32 %v72, %v124
    %v126 = vpop.f32.mrb[0].mxu0
    %v127 = vpop.f32.mrb[0].mxu0
    %v128 = vpop.f32.mrb[0].mxu0
    %129 = vdwg.mxu0
    %v130 = vmax.f32 %v125, 0.0
    %v131 = vpack.c.bf16 %v130, %v130
    %v132 = vld [vmem:[#allocation7] sm:$0xf]
    %v133 = vld [vmem:[#allocation7 + $0x4] sm:$0xf]
    %v134 = vld [vmem:[#allocation7 + $0x8] sm:$0xf]
    %v135 = vld [vmem:[#allocation7 + $0xc] sm:$0xf]
    %v136 = vld [vmem:[#allocation7 + $0x10] sm:$0xf]
    %v137 = vld [vmem:[#allocation7 + $0x14] sm:$0xf]
    %v138 = vld [vmem:[#allocation7 + $0x18] sm:$0xf]
    %v139 = vld [vmem:[#allocation7 + $0x1c] sm:$0xf]
    %v140 = vld [vmem:[#allocation7 + $0x20] sm:$0xf]
    %v141 = vld [vmem:[#allocation7 + $0x24] sm:$0xf]
    %v142 = vld [vmem:[#allocation7 + $0x28] sm:$0xf]
    %v143 = vld [vmem:[#allocation7 + $0x2c] sm:$0xf]
    %v144 = vld [vmem:[#allocation7 + $0x30] sm:$0xf]
    %v145 = vld [vmem:[#allocation7 + $0x34] sm:$0xf]
    %v146 = vld [vmem:[#allocation7 + $0x38] sm:$0xf]
    %v147 = vld [vmem:[#allocation7 + $0x3c] sm:$0xf]
    %v148 = vld [vmem:[%s4] sm:$0x1]
    %v150 = vlaneseq
    %v151 = vshrl.u32 %v150, 7
    %v152 = vsub.s32 0, %v151
    %v153 = vrot.slane %v148, %v152
    %v171 = vunpack.c.l.b16 %v132
    %v172 = vunpack.c.l.b16 %v133
    %v173 = vunpack.c.l.b16 %v134
    %v174 = vunpack.c.l.b16 %v135
    %v175 = vunpack.c.l.b16 %v136
    %v176 = vunpack.c.l.b16 %v137
    %v177 = vunpack.c.l.b16 %v138
    %v178 = vunpack.c.l.b16 %v139
    %v179 = vunpack.c.l.b16 %v140
    %v180 = vunpack.c.l.b16 %v141
    %v181 = vunpack.c.l.b16 %v142
    %v182 = vunpack.c.l.b16 %v143
    %v183 = vunpack.c.l.b16 %v144
    %v184 = vunpack.c.l.b16 %v145
    %v185 = vunpack.c.l.b16 %v146
    %v186 = vunpack.c.l.b16 %v147
    %v187 = vpack.c.b16 %v172, %v171
    %v188 = vpack.c.b16 %v174, %v173
    %v189 = vpack.c.b16 %v176, %v175
    %v190 = vpack.c.b16 %v178, %v177
    %v191 = vpack.c.b16 %v180, %v179
    %v192 = vpack.c.b16 %v182, %v181
    %v193 = vpack.c.b16 %v184, %v183
    %v194 = vpack.c.b16 %v186, %v185
    %203 = vmatprep.subr.bf16.mxu0 0
    %204 = vmatpush1.bf16.msra.mxu0 %v187
    %205 = vmatprep.subr.bf16.mxu0 0
    %206 = vmatpush1.bf16.msra.mxu0 %v188
    %207 = vmatprep.subr.bf16.mxu0 0
    %208 = vmatpush1.bf16.msra.mxu0 %v189
    %209 = vmatprep.subr.bf16.mxu0 0
    %210 = vmatpush1.bf16.msra.mxu0 %v190
    %211 = vmatprep.subr.bf16.mxu0 0
    %212 = vmatpush1.bf16.msra.mxu0 %v191
    %213 = vmatprep.subr.bf16.mxu0 0
    %214 = vmatpush1.bf16.msra.mxu0 %v192
    %215 = vmatprep.subr.bf16.mxu0 0
    %216 = vmatpush1.bf16.msra.mxu0 %v193
    %217 = vmatprep.subr.bf16.mxu0 0
    %218 = vmatpush1.bf16.msra.mxu0 %v194
    %219 = vmatprep.subr.bf16.mxu0 0
    %220 = vmatpush1.bf16.msra.mxu0 0
    %221 = vmatprep.subr.bf16.mxu0 0
    %222 = vmatpush1.bf16.msra.mxu0 0
    %223 = vmatprep.subr.bf16.mxu0 0
    %224 = vmatpush1.bf16.msra.mxu0 0
    %225 = vmatprep.subr.bf16.mxu0 0
    %226 = vmatpush1.bf16.msra.mxu0 0
    %227 = vmatprep.subr.bf16.mxu0 0
    %228 = vmatpush1.bf16.msra.mxu0 0
    %229 = vmatprep.subr.bf16.mxu0 0
    %230 = vmatpush1.bf16.msra.mxu0 0
    %231 = vmatprep.subr.bf16.mxu0 0
    %232 = vmatpush1.bf16.msra.mxu0 0
    %233 = vmatprep.subr.bf16.mxu0 0
    %234 = vmatpush1.bf16.msra.mxu0 0
    %235 = vmatprep.mubr.bf16.mxu0 0
    %236 = vmatmul.mubr.bf16.gmra.mrb[0].mxu0 %v131
    %v237 = vpop.f32.mrb[0].mxu0
    %v238 = vadd.f32 %v153, %v237
    %v239 = vpop.f32.mrb[0].mxu0
    %v240 = vpop.f32.mrb[0].mxu0
    %v241 = vpop.f32.mrb[0].mxu0
    %242 = vdwg.mxu0
    %v243 = vmul.f32 %v238, 0.5
    %v244 = vtanh.pop %v243
    %v245 = vmul.f32 %v244, 0.5
    %v246 = vadd.f32 %v245, 0.5
    %v247 = vpack.c.bf16 %v246, %v246
    %248 = vst [vmem:[#allocation8] sm:$0xf] %v247
    // Predicated region
    $region34: #{tpu_custom_call.1} parent=1 // pred_check
      _
    $region35: #{tpu_custom_call.1} parent=1 // pred_check_branch
      %250 = sbr.rel (0) target = $region37
    $region36: #{tpu_custom_call.1} parent=1 // pred_region
      %s252 = ssub.s32 64, 64
      %253 = vsyncadd [#allocation4], %s252
      %s255 = sshll.u32 [#allocation8], 4
      %s256 = int_to_ptr.vmem [resolvable:$true] %s255
      %258 = dma.vmem_to_hbm [thread:$0]  %s256, 64, %s5, [#allocation4]
    $region37: #{tpu_custom_call.1} parent=1 // pred_fallthru
      _
    // Predicated region
    $region38: #{tpu_custom_call.1} parent=1 // pred_check
      _
    $region39: #{tpu_custom_call.1} parent=1 // pred_check_branch
      %260 = sbr.rel (0) target = $region41
    $region40: #{tpu_custom_call.1} parent=1 // pred_region
      %261 = dma.done [#allocation4], 64
    $region41: #{tpu_custom_call.1} parent=1 // pred_fallthru
      _
    %262 = vsyncpa [#allocation3], 1
    %263 = vsyncpa [#allocation6], 1
    %264 = vsyncpa [#allocation4], 1

</llo_original>
